<compile_context>
chip_gen: v7x
topology: tpu7x:2x2x1
jax: 0.10.0
libtpu: 0.0.40
codegen_flags: <defaults>
</compile_context>

<pallas_src>
import math
from functools import partial

import jax
import jax.numpy as jnp
from jax.experimental import pallas as pl
from jax.experimental.pallas import tpu as pltpu


def B(rho):
    # rho must be a static Python number; |rho - 1| must be <= 1 for the sqrt.
    b = 0.0 if rho == 1 else (math.sqrt(1.0 - (rho - 1.0) ** 2) - 1.0) / (rho - 1.0)
    return b


def _abrelu_kernel(x_ref, o_ref, *, b):
    x = x_ref[...]
    zero = jnp.zeros((), dtype=x.dtype)
    if b == 0.0:
        # rho == 1 degenerates to plain ReLU: single VPU max.
        o_ref[...] = jnp.maximum(x, zero)
    else:
        # b*min(x,0) + max(x,0) == where(x > 0, x, b*x): 1 cmp + 1 mul + 1 select.
        o_ref[...] = jnp.where(x > zero, x, x * b)


_MAX_LANE = 2048            # widest lane-dense last dim we try (multiple of 128)
_FALLBACK_LANE = 512        # used only when nothing divides x.size
_MAX_TILE_BYTES = 8 << 20   # 8 MiB per buffer; 4 live buffers = 32 MiB VMEM


def _round_up(n, m):
    return ((n + m - 1) // m) * m


def _pick_lane(total):
    """Largest multiple of 128 (<= _MAX_LANE) that divides `total`, else 0."""
    lane = _MAX_LANE
    while lane >= 128:
        if total % lane == 0:
            return lane
        lane -= 128
    return 0


def abrelu(x, rho=1, donate_input=False):
    """ABReLU forward pass. x: any-shape float array (e.g. NCHW conv activations)."""
    b = float(B(rho))  # static Python float -> folds into a VPU immediate

    total = x.size
    itemsize = jnp.dtype(x.dtype).itemsize
    sublane = max(8, 32 // itemsize)  # 8 (f32), 16 (bf16), 32 (int8/fp8)

    lane = _pick_lane(total)
    if lane:
        # Zero-copy path: reshape is a free view of the contiguous activation.
        x2d = x.reshape(total // lane, lane)
        pad = 0
    else:
        # Rare fallback for sizes not divisible by 128: pad the flat vector.
        lane = _FALLBACK_LANE
        pad = _round_up(total, lane) - total
        x2d = jnp.pad(x.reshape(-1), (0, pad)).reshape(-1, lane)

    rows = x2d.shape[0]

    # Constant-byte tiles (sublane aligned) so every dtype gets the same DMA size.
    tile_rows = max(sublane, (_MAX_TILE_BYTES // (lane * itemsize)) // sublane * sublane)
    if tile_rows >= rows:
        tile_rows = rows  # single block == full array dims (always legal)
    grid = (pl.cdiv(rows, tile_rows),)  # ragged final block handled by Pallas

    out2d = pl.pallas_call(
        partial(_abrelu_kernel, b=b),
        out_shape=jax.ShapeDtypeStruct((rows, lane), x.dtype),
        grid=grid,
        in_specs=[pl.BlockSpec((tile_rows, lane), lambda i: (i, 0))],
        out_specs=pl.BlockSpec((tile_rows, lane), lambda i: (i, 0)),
        compiler_params=pltpu.CompilerParams(
            dimension_semantics=("parallel",),   # splits rows across v7x's 2 TCs
            vmem_limit_bytes=48 << 20,           # safe on v5e/v6e/v7x
        ),
        input_output_aliases=({0: 0} if donate_input else {}),
    )(x2d)

    if pad:
        return out2d.reshape(-1)[:total].reshape(x.shape)
    return out2d.reshape(x.shape)


if __name__ == "__main__":
    key = jax.random.PRNGKey(0)
    # Small NCHW input, consistent with a conv-style module.
    x = jax.random.normal(key, (2, 4, 16, 16), dtype=jnp.float32)

    # rho=1 is the module default (b=0 -> plain ReLU); also exercise rho=1.5.
    for rho in (1, 1.5):
        out = jax.block_until_ready(abrelu(x, rho=rho))
        b = B(rho)
        ref = b * jnp.minimum(x, 0.0) + jnp.maximum(x, 0.0)
        assert out.shape == x.shape and out.dtype == x.dtype
        assert jnp.allclose(out, ref, atol=1e-6), f"mismatch for rho={rho}"

    # Odd-sized input exercises the padded fallback path (size not % 128).
    x_odd = jax.random.normal(key, (3, 5, 7, 11), dtype=jnp.float32)
    out_odd = jax.block_until_ready(abrelu(x_odd, rho=1.5))
    b = B(1.5)
    ref_odd = b * jnp.minimum(x_odd, 0.0) + jnp.maximum(x_odd, 0.0)
    assert out_odd.shape == x_odd.shape
    assert jnp.allclose(out_odd, ref_odd, atol=1e-6), "mismatch on odd-sized input"

    print("KERNEL_OK")
</pallas_src>

<mosaic_0001>
module attributes {stable_mosaic.version = 11 : i64} {
  func.func @_abrelu_kernel(%arg0: i32, %arg1: memref<1x2048xf32, #tpu.memory_space<vmem>>, %arg2: memref<1x2048xf32, #tpu.memory_space<vmem>>) attributes {dimension_semantics = [#tpu.dimension_semantics<parallel>], iteration_bounds = array<i64: 1>, scalar_prefetch = 0 : i64, scratch_operands = 0 : i64, tpu.core_type = #tpu.core_type<tc>, window_params = [{transform_indices = @transform_0, window_bounds = array<i64: 1, 2048>}, {transform_indices = @transform_1, window_bounds = array<i64: 1, 2048>}]} {
    %c0 = arith.constant 0 : index
    %c0_0 = arith.constant 0 : index
    %0 = vector.load %arg1[%c0, %c0_0] : memref<1x2048xf32, #tpu.memory_space<vmem>>, vector<1x2048xf32>
    %cst = arith.constant 0.000000e+00 : f32
    %1 = vector.broadcast %cst : f32 to vector<1x2048xf32>
    %2 = arith.maximumf %0, %1 : vector<1x2048xf32>
    %c0_1 = arith.constant 0 : index
    %c0_2 = arith.constant 0 : index
    %3 = vector.load %arg2[%c0_1, %c0_2] : memref<1x2048xf32, #tpu.memory_space<vmem>>, vector<1x2048xf32>
    tpu.vector_store %arg2[%c0_1, %c0_2], %2 {strides = array<i32>} : memref<1x2048xf32, #tpu.memory_space<vmem>>, vector<1x2048xf32>,
    return
  }
  func.func @transform_0(%arg0: i32) -> (i32, i32) {
    %c0_i32 = arith.constant 0 : i32
    %c0_i32_0 = arith.constant 0 : i32
    return %arg0, %c0_i32 : i32, i32
  }
  func.func @transform_1(%arg0: i32) -> (i32, i32) {
    %c0_i32 = arith.constant 0 : i32
    %c0_i32_0 = arith.constant 0 : i32
    return %arg0, %c0_i32 : i32, i32
  }
}

</mosaic_0001>

<llo_original>
// kernel: tpu_custom_call.1
$region0: #{tpu_custom_call.1}
  #allocation0 [shape = 'u32[]', space=smem, size = 0x4, offset = 0x4, fixed_abs, tag = 'smem constant byte address 0x4 - core index']
  #allocation1 [shape = 'u32[144,128]{1,0:T(1,128)}', space=vmem, size = 0x12000, scoped, tag = 'internal scratch']
  %s0 = inlined_call_operand.hbm [shape: f32[1,2048], index: 0, kind: input, shape index: {}]
  %s1 = inlined_call_operand.hbm [shape: f32[1,2048], index: 1, kind: output, shape index: {}]
  %s2 = sld [smem:[#allocation0]]
  $region18: #{tpu_custom_call.1} parent=0
    _
  %s4 = ssub.s32 1, %s2
  %s5 = scalar_select 0, %s4, %s2
  $region1: #{tpu_custom_call.1} parent=0
    #allocation2 [shape = 'u8[8192]{0}', space=vmem, size = 0x2000, scoped, tag = 'input window, operand 0, single buffered']
    #allocation3 [shape = 's32[1]{0}', space=sflag, size = 0x4, scoped, tag = 'scoped memory for tpu_custom_call.1']
    #allocation4 [shape = 's32[1]{0}', space=sflag, size = 0x4, scoped, tag = 'scoped memory for tpu_custom_call.1']
    #allocation5 [shape = 'u8[8192]{0}', space=vmem, size = 0x2000, scoped, tag = 'output window, operand 0, single buffered']
    %6 = vsyncpa [#allocation3], 0
    %7 = vsyncpa [#allocation4], 0
    // Predicated region
    $region2: #{tpu_custom_call.1} parent=1 // pred_check
      _
    $region3: #{tpu_custom_call.1} parent=1 // pred_check_branch
      %9 = sbr.rel (0) target = $region5
    $region4: #{tpu_custom_call.1} parent=1 // pred_region
      %s11 = ssub.s32 256, 256
      %12 = vsyncadd [#allocation3], %s11
      %s14 = sshll.u32 [#allocation2], 4
      %s15 = int_to_ptr.vmem [resolvable:$true] %s14
      %17 = dma.hbm_to_vmem [thread:$0]  %s0, 256, %s15, [#allocation3]
    $region5: #{tpu_custom_call.1} parent=1 // pred_fallthru
      _
    // Predicated region
    $region6: #{tpu_custom_call.1} parent=1 // pred_check
      _
    $region7: #{tpu_custom_call.1} parent=1 // pred_check_branch
      %19 = sbr.rel (0) target = $region9
    $region8: #{tpu_custom_call.1} parent=1 // pred_region
      %20 = dma.done [#allocation3], 256
    $region9: #{tpu_custom_call.1} parent=1 // pred_fallthru
      _
    %v21 = vld [vmem:[#allocation2] sm:$0xff]
    %v22 = vld [vmem:[#allocation2 + $0x8] sm:$0xff]
    %v23 = vmax.f32 %v21, 0.0
    %v24 = vmax.f32 %v22, 0.0
    %25 = vst [vmem:[#allocation5] sm:$0xff] %v23
    %26 = vst [vmem:[#allocation5 + $0x8] sm:$0xff] %v24
    // Predicated region
    $region10: #{tpu_custom_call.1} parent=1 // pred_check
      _
    $region11: #{tpu_custom_call.1} parent=1 // pred_check_branch
      %28 = sbr.rel (0) target = $region13
    $region12: #{tpu_custom_call.1} parent=1 // pred_region
      %s30 = ssub.s32 256, 256
      %31 = vsyncadd [#allocation4], %s30
      %s33 = sshll.u32 [#allocation5], 4
      %s34 = int_to_ptr.vmem [resolvable:$true] %s33
      %36 = dma.vmem_to_hbm [thread:$0]  %s34, 256, %s1, [#allocation4]
    $region13: #{tpu_custom_call.1} parent=1 // pred_fallthru
      _
    // Predicated region
    $region14: #{tpu_custom_call.1} parent=1 // pred_check
      _
    $region15: #{tpu_custom_call.1} parent=1 // pred_check_branch
      %38 = sbr.rel (0) target = $region17
    $region16: #{tpu_custom_call.1} parent=1 // pred_region
      %39 = dma.done [#allocation4], 256
    $region17: #{tpu_custom_call.1} parent=1 // pred_fallthru
      _
    %40 = vsyncpa [#allocation3], 1
    %41 = vsyncpa [#allocation4], 1

</llo_original>
